<compile_context>
chip_gen: v6e
topology: v6e:2x2x1
jax: 0.10.0
libtpu: 0.0.40
codegen_flags: <defaults>
</compile_context>

<pallas_src>
import math
import numpy as np
import jax
import jax.numpy as jnp
from jax.experimental import pallas as pl
from jax.experimental.pallas import tpu as pltpu

SCALE = 0.003921569  # constant used by the PyTorch module (truncated 1/255)


def _nearest_index(out_size: int, in_size: int) -> np.ndarray:
    # PyTorch 'nearest': src = min(floor(dst * in/out), in - 1), float32 scale.
    scale = np.float32(in_size) / np.float32(out_size)
    idx = np.floor(np.arange(out_size, dtype=np.float32) * scale).astype(np.int64)
    return np.minimum(idx, in_size - 1)


def _pick_tile(out_size: int, in_size: int, idx_global: np.ndarray,
               target_out: int, out_mult: int, in_mult: int):
    """Pick an output tile size t_out (dividing out_size) such that every output
    tile reads exactly the aligned input slab [h*t_in, (h+1)*t_in) and the local
    nearest-index pattern is identical in every tile.  Verified numerically
    against the float32 index table so it matches PyTorch bit-for-bit.
    Returns (t_out, t_in, local_index_pattern); falls back to full extent."""
    g = math.gcd(out_size, in_size)
    base_out = out_size // g
    base_in = in_size // g
    fallback = (out_size, in_size, idx_global.astype(np.int64))
    for d in sorted((d for d in range(1, g + 1) if g % d == 0), reverse=True):
        t_out = base_out * d
        t_in = base_in * d
        if t_out >= out_size:
            continue  # whole extent handled by fallback
        if t_out > target_out or (t_out % out_mult) or (t_in % in_mult):
            continue  # respect (8, 128) block-shape / lane-density constraints
        n_t = out_size // t_out
        loc = (idx_global.reshape(n_t, t_out)
               - (np.arange(n_t, dtype=np.int64) * t_in)[:, None])
        if loc.min() < 0 or loc.max() >= t_in or not np.all(loc == loc[0]):
            continue
        return t_out, t_in, loc[0]
    return fallback


def _resize_swap_scale_kernel(r_ref, ct_ref, x_ref, o_ref):
    # r_ref : (TH_OUT, TH_IN)  one-hot row selection * SCALE (shared by all tiles)
    # ct_ref: (TW_IN,  TW_OUT) one-hot column selection      (shared by all tiles)
    # x_ref : (1, 1, TH_IN, TW_IN)  input slab (channel already swapped by index_map)
    # o_ref : (1, 1, TH_OUT, TW_OUT)
    x = x_ref[0, 0]                                                        # (TH_IN, TW_IN)
    rows = jnp.dot(r_ref[...], x, preferred_element_type=jnp.float32)      # (TH_OUT, TW_IN)
    out = jnp.dot(rows, ct_ref[...], preferred_element_type=jnp.float32)   # (TH_OUT, TW_OUT)
    o_ref[0, 0] = out.astype(o_ref.dtype)


def make_prep(x: jax.Array, input_shape, *, target_th: int = 128, target_tw: int = 256) -> jax.Array:
    """x: (N, 3, H_in, W_in) float32.  input_shape: like the torch model, (N, C, H_out, W_out)."""
    N, C, H_in, W_in = x.shape
    assert C == 3, "channel swap [2,1,0] assumes 3 channels"
    H_out, W_out = int(input_shape[2]), int(input_shape[3])

    ri = _nearest_index(H_out, H_in)                 # (H_out,)
    ci = _nearest_index(W_out, W_in)                 # (W_out,)

    # Aligned spatial tiles: sublane dim (H) multiples of 8, lane dim (W) of 128.
    TH_OUT, TH_IN, loc_h = _pick_tile(H_out, H_in, ri, target_th, 8, 8)
    TW_OUT, TW_IN, loc_w = _pick_tile(W_out, W_in, ci, target_tw, 128, 128)

    # Per-tile one-hot selection matrices (identical for every tile).
    # SCALE is folded into R so no separate scaling pass is needed in-kernel.
    R = (loc_h[:, None] == np.arange(TH_IN)[None, :]).astype(np.float32) * np.float32(SCALE)
    CT = (np.arange(TW_IN)[:, None] == loc_w[None, :]).astype(np.float32)
    R = jnp.asarray(R)                               # (TH_OUT, TH_IN)
    CT = jnp.asarray(CT)                             # (TW_IN,  TW_OUT)

    grid = (N, C, H_out // TH_OUT, W_out // TW_OUT)

    return pl.pallas_call(
        _resize_swap_scale_kernel,
        out_shape=jax.ShapeDtypeStruct((N, C, H_out, W_out), x.dtype),
        grid_spec=pltpu.PrefetchScalarGridSpec(
            num_scalar_prefetch=0,
            grid=grid,
            in_specs=[
                # Constant selection matrices: index_map is constant so they are
                # DMA'd once and stay resident (they are tiny now).
                pl.BlockSpec((TH_OUT, TH_IN), lambda n, c, h, w: (0, 0)),
                pl.BlockSpec((TW_IN, TW_OUT), lambda n, c, h, w: (0, 0)),
                # Channel swap happens here: output channel c reads input channel 2-c.
                # Row/col tiling: output tile (h, w) reads exactly input block (h, w)
                # of shape (TH_IN, TW_IN) thanks to the aligned-tile construction.
                pl.BlockSpec((1, 1, TH_IN, TW_IN), lambda n, c, h, w: (n, 2 - c, h, w)),
            ],
            out_specs=pl.BlockSpec((1, 1, TH_OUT, TW_OUT), lambda n, c, h, w: (n, c, h, w)),
        ),
        compiler_params=pltpu.CompilerParams(
            dimension_semantics=("parallel", "parallel", "parallel", "parallel")),
    )(R, CT, x)


def _reference(x: np.ndarray, input_shape) -> np.ndarray:
    # Pure-numpy reference mirroring the PyTorch module.
    N, C, H_in, W_in = x.shape
    H_out, W_out = int(input_shape[2]), int(input_shape[3])
    ri = _nearest_index(H_out, H_in)
    ci = _nearest_index(W_out, W_in)
    y = x[:, :, ri][:, :, :, ci]
    y = y[:, ::-1, :, :]          # cat([x[:,2:3], x[:,1:2], x[:,0:1]], dim=1)
    return (y.astype(np.float32) * np.float32(SCALE)).astype(x.dtype)


if __name__ == "__main__":
    key = jax.random.PRNGKey(0)
    # small image batch, 3 channels, 8x8 spatial -> resized to 16x16
    x = jax.random.uniform(key, (2, 3, 8, 8), dtype=jnp.float32) * 255.0
    target_input_shape = (2, 3, 16, 16)     # Model(input_shape=...) ; forward uses [2:]

    out = make_prep(x, target_input_shape)
    out = jax.block_until_ready(out)

    ref = _reference(np.asarray(x), target_input_shape)
    np.testing.assert_allclose(np.asarray(out), ref, rtol=1e-6, atol=1e-6)

    print("KERNEL_OK")
</pallas_src>

<mosaic_0001>
module attributes {stable_mosaic.version = 11 : i64} {
  func.func @_resize_swap_scale_kernel(%arg0: i32, %arg1: i32, %arg2: i32, %arg3: i32, %arg4: memref<16x8xf32, #tpu.memory_space<vmem>>, %arg5: memref<8x16xf32, #tpu.memory_space<vmem>>, %arg6: memref<1x1x8x8xf32, #tpu.memory_space<vmem>>, %arg7: memref<1x1x16x16xf32, #tpu.memory_space<vmem>>) attributes {dimension_semantics = [#tpu.dimension_semantics<parallel>, #tpu.dimension_semantics<parallel>, #tpu.dimension_semantics<parallel>, #tpu.dimension_semantics<parallel>], iteration_bounds = array<i64: 2, 3, 1, 1>, scalar_prefetch = 0 : i64, scratch_operands = 0 : i64, tpu.core_type = #tpu.core_type<tc>, window_params = [{pipeline_mode = #tpu.pipeline_mode<synchronous>, transform_indices = @transform_0, window_bounds = array<i64: 16, 8>}, {pipeline_mode = #tpu.pipeline_mode<synchronous>, transform_indices = @transform_1, window_bounds = array<i64: 8, 16>}, {transform_indices = @transform_2, window_bounds = array<i64: 1, 1, 8, 8>}, {transform_indices = @transform_3, window_bounds = array<i64: 1, 1, 16, 16>}]} {
    %c0 = arith.constant 0 : index
    %c0_0 = arith.constant 0 : index
    %c0_1 = arith.constant 0 : index
    %c0_2 = arith.constant 0 : index
    %0 = vector.load %arg6[%c0, %c0_0, %c0_1, %c0_2] : memref<1x1x8x8xf32, #tpu.memory_space<vmem>>, vector<1x1x8x8xf32>
    %1 = vector.shape_cast %0 : vector<1x1x8x8xf32> to vector<8x8xf32>
    %c0_3 = arith.constant 0 : index
    %c0_4 = arith.constant 0 : index
    %2 = vector.load %arg4[%c0_3, %c0_4] : memref<16x8xf32, #tpu.memory_space<vmem>>, vector<16x8xf32>
    %cst = arith.constant dense<0.000000e+00> : vector<16x8xf32>
    %3 = tpu.matmul %2, %1, %cst {dimension_numbers = #tpu.dot_dimension_numbers<[1], [0], [0], [1], [0, 0, 1, 1], [], []>} : vector<16x8xf32>, vector<8x8xf32>, vector<16x8xf32> -> vector<16x8xf32>
    %c0_5 = arith.constant 0 : index
    %c0_6 = arith.constant 0 : index
    %4 = vector.load %arg5[%c0_5, %c0_6] : memref<8x16xf32, #tpu.memory_space<vmem>>, vector<8x16xf32>
    %cst_7 = arith.constant dense<0.000000e+00> : vector<16x16xf32>
    %5 = tpu.matmul %3, %4, %cst_7 {dimension_numbers = #tpu.dot_dimension_numbers<[1], [0], [0], [1], [0, 0, 1, 1], [], []>} : vector<16x8xf32>, vector<8x16xf32>, vector<16x16xf32> -> vector<16x16xf32>
    %c0_8 = arith.constant 0 : index
    %c0_9 = arith.constant 0 : index
    %c0_10 = arith.constant 0 : index
    %c0_11 = arith.constant 0 : index
    %6 = vector.load %arg7[%c0_8, %c0_9, %c0_10, %c0_11] : memref<1x1x16x16xf32, #tpu.memory_space<vmem>>, vector<1x1x16x16xf32>
    %7 = vector.shape_cast %6 : vector<1x1x16x16xf32> to vector<16x16xf32>
    %8 = vector.shape_cast %5 : vector<16x16xf32> to vector<1x1x16x16xf32>
    tpu.vector_store %arg7[%c0_8, %c0_9, %c0_10, %c0_11], %8 {strides = array<i32>} : memref<1x1x16x16xf32, #tpu.memory_space<vmem>>, vector<1x1x16x16xf32>,
    return
  }
  func.func @transform_0(%arg0: i32, %arg1: i32, %arg2: i32, %arg3: i32) -> (i32, i32) {
    %c0_i32 = arith.constant 0 : i32
    %c0_i32_0 = arith.constant 0 : i32
    %c0_i32_1 = arith.constant 0 : i32
    return %c0_i32, %c0_i32_0 : i32, i32
  }
  func.func @transform_1(%arg0: i32, %arg1: i32, %arg2: i32, %arg3: i32) -> (i32, i32) {
    %c0_i32 = arith.constant 0 : i32
    %c0_i32_0 = arith.constant 0 : i32
    %c0_i32_1 = arith.constant 0 : i32
    return %c0_i32, %c0_i32_0 : i32, i32
  }
  func.func @transform_2(%arg0: i32, %arg1: i32, %arg2: i32, %arg3: i32) -> (i32, i32, i32, i32) {
    %c2_i32 = arith.constant 2 : i32
    %0 = arith.subi %c2_i32, %arg1 : i32
    %c0_i32 = arith.constant 0 : i32
    return %arg0, %0, %arg2, %arg3 : i32, i32, i32, i32
  }
  func.func @transform_3(%arg0: i32, %arg1: i32, %arg2: i32, %arg3: i32) -> (i32, i32, i32, i32) {
    %c0_i32 = arith.constant 0 : i32
    return %arg0, %arg1, %arg2, %arg3 : i32, i32, i32, i32
  }
}

</mosaic_0001>

<llo_original>
// kernel: tpu_custom_call.1
$region0: #{tpu_custom_call.1}
  #allocation0 [shape = 'u32[]', space=smem, size = 0x4, offset = 0x4, fixed_abs, tag = 'smem constant byte address 0x4 - core index']
  #allocation1 [shape = 'u32[144,128]{1,0:T(1,128)}', space=vmem, size = 0x12000, scoped, tag = 'internal scratch']
  %s0 = inlined_call_operand.vmem [shape: f32[16,8], index: 0, kind: input, shape index: {}]
  %s1 = inlined_call_operand.vmem [shape: f32[8,16], index: 1, kind: input, shape index: {}]
  %s2 = inlined_call_operand.hbm [shape: f32[2,3,8,8], index: 2, kind: input, shape index: {}]
  %s3 = inlined_call_operand.hbm [shape: f32[2,3,16,16], index: 3, kind: output, shape index: {}]
  %s4 = sld [smem:[#allocation0]]
  $region49: #{tpu_custom_call.1} parent=0
    _
  %s6 = ssub.s32 1, %s4
  %s7 = scalar_select 0, %s6, %s4
  $region1: #{tpu_custom_call.1} parent=0
    #allocation2 [shape = 'u8[8192]{0}', space=vmem, size = 0x2000, scoped, tag = 'input window, operand 2']
    #allocation3 [shape = 's32[2]{0}', space=sflag, size = 0x8, scoped, tag = 'scoped memory for tpu_custom_call.1']
    #allocation4 [shape = 's32[2]{0}', space=sflag, size = 0x8, scoped, tag = 'scoped memory for tpu_custom_call.1']
    #allocation5 [shape = 'u8[16384]{0}', space=vmem, size = 0x4000, scoped, tag = 'output window, operand 0']
    %8 = vsyncpa [#allocation3], 0
    %s9 = scalar_lea.sflag [#allocation3], 1
    %10 = vsyncpa %s9, 0
    %11 = vsyncpa [#allocation4], 0
    %s12 = scalar_lea.sflag [#allocation4], 1
    %13 = vsyncpa %s12, 0
    loop: start=0, step=1, limit=8
    $region2: #{tpu_custom_call.1} parent=1 // loop_pre_header
      _
    $region3: #{tpu_custom_call.1} parent=1 // loop_header
      %s15 = sphi 0, %s19
      %p16 = scmp.ge.s32.totalorder %s15, 8
      %s22 = sphi 0, %s48
      %s23 = sphi 0, %s44
      %s24 = sphi 0, %s40
      %s25 = sphi 0, %s36
      %s26 = sphi 0, %s22
      %s27 = sphi 0, %s23
      %s28 = sphi 0, %s24
      %s29 = sphi 0, %s25
      %s30 = sphi 0, %s26
      %s31 = sphi 0, %s27
      %s32 = sphi 0, %s28
      %s33 = sphi 0, %s29
      %s49 = sphi 0, %s49
      %s51 = sphi 0, %s49
      %s52 = sphi 0, %s51
      %s66 = sphi 0, %s52
      %s70 = sphi 0, %s70
      %s72 = sphi 0, %s70
      %s73 = sphi 0, %s72
      %s87 = sphi 0, %s73
      %s101 = sphi 0, %s103
      %s104 = sphi 0, %s101
      %s105 = sphi 0, %s104
      %s121 = sphi 0, %s105
      %s133 = sphi 0, %s135
      %s136 = sphi 0, %s133
      %s137 = sphi 0, %s136
      %s153 = sphi 0, %s137
    $region4: #{tpu_custom_call.1} parent=1 // loop_header_branch
      %18 = sbr.rel (%p16) target = $region8
    $region5: #{tpu_custom_call.1} parent=1 // loop_body
      %s20 = ssub.s32 %s15, 1
      %s21 = ssub.s32 %s15, 2
      %s34 = sadd.s32 1, %s25
      %p35 = scmp.ge.s32.totalorder %s34, 1
      %s36 = scalar_select %p35, 0, %s34
      %s37 = sadd.s32 1, %s24
      %s38 = scalar_select %p35, %s37, %s24
      %p39 = scmp.ge.s32.totalorder %s38, 1
      %s40 = scalar_select %p39, 0, %s38
      %s41 = sadd.s32 1, %s23
      %s42 = scalar_select %p39, %s41, %s23
      %p43 = scmp.ge.s32.totalorder %s42, 3
      %s44 = scalar_select %p43, 0, %s42
      %s45 = sadd.s32 1, %s22
      %s46 = scalar_select %p43, %s45, %s22
      %p47 = scmp.ge.s32.totalorder %s46, 2
      %s48 = scalar_select %p47, 0, %s46
      %s50 = sadd.s32 %s49, 1
      %p53 = scmp.eq.s32.totalorder %s15, 5
      %p54 = scmp.ne.s32.totalorder %s49, %s51
      %p55 = scmp.eq.s32.totalorder %s15, 0
      %p56 = por %p54, %p55
      %p57 = scmp.ne.s32.totalorder %s49, %s51
      %p58 = scmp.eq.s32.totalorder %s20, 5
      %p59 = por %p57, %p58
      %p60 = scmp.ne.s32.totalorder %s51, %s52
      %p61 = scmp.eq.s32.totalorder %s20, 0
      %p62 = por %p60, %p61
      %p63 = scmp.ne.s32.totalorder %s51, %s52
      %p64 = scmp.eq.s32.totalorder %s21, 5
      %p65 = por %p63, %p64
      %p67 = scmp.ne.s32.totalorder %s52, %s66
      %p68 = scmp.eq.s32.totalorder %s21, 0
      %p69 = por %p67, %p68
      %s71 = sadd.s32 %s70, 1
      %p74 = scmp.eq.s32.totalorder %s15, 5
      %p75 = scmp.ne.s32.totalorder %s70, %s72
      %p76 = scmp.eq.s32.totalorder %s15, 0
      %p77 = por %p75, %p76
      %p78 = scmp.ne.s32.totalorder %s70, %s72
      %p79 = scmp.eq.s32.totalorder %s20, 5
      %p80 = por %p78, %p79
      %p81 = scmp.ne.s32.totalorder %s72, %s73
      %p82 = scmp.eq.s32.totalorder %s20, 0
      %p83 = por %p81, %p82
      %p84 = scmp.ne.s32.totalorder %s72, %s73
      %p85 = scmp.eq.s32.totalorder %s21, 5
      %p86 = por %p84, %p85
      %p88 = scmp.ne.s32.totalorder %s73, %s87
      %p89 = scmp.eq.s32.totalorder %s21, 0
      %p90 = por %p88, %p89
      %s91 = ssub.s32 2, %s23
      %s92 = ssub.s32 2, %s44
      %s93 = ssub.s32 %s22, %s48
      %s94 = ssub.s32 %s91, %s92
      %s95 = sor.u32 %s93, %s94
      %s96 = ssub.s32 %s24, %s40
      %s97 = sor.u32 %s95, %s96
      %s98 = ssub.s32 %s25, %s36
      %s99 = sor.u32 %s97, %s98
      %p100 = scmp.eq.s32.totalorder %s99, 0
      %s102 = sadd.s32 %s101, 1
      %s103 = scalar_select %p100, %s101, %s102
      %p106 = pneg %p100
      %p107 = scmp.eq.s32.totalorder %s15, 5
      %p108 = por %p106, %p107
      %p109 = scmp.ne.s32.totalorder %s101, %s104
      %p110 = scmp.eq.s32.totalorder %s15, 0
      %p111 = por %p109, %p110
      %p112 = scmp.ne.s32.totalorder %s101, %s104
      %p113 = scmp.eq.s32.totalorder %s20, 5
      %p114 = por %p112, %p113
      %p115 = scmp.ne.s32.totalorder %s104, %s105
      %p116 = scmp.eq.s32.totalorder %s20, 0
      %p117 = por %p115, %p116
      %p118 = scmp.ne.s32.totalorder %s104, %s105
      %p119 = scmp.eq.s32.totalorder %s21, 5
      %p120 = por %p118, %p119
      %p122 = scmp.ne.s32.totalorder %s105, %s121
      %p123 = scmp.eq.s32.totalorder %s21, 0
      %p124 = por %p122, %p123
      %s125 = ssub.s32 %s22, %s48
      %s126 = ssub.s32 %s23, %s44
      %s127 = sor.u32 %s125, %s126
      %s128 = ssub.s32 %s24, %s40
      %s129 = sor.u32 %s127, %s128
      %s130 = ssub.s32 %s25, %s36
      %s131 = sor.u32 %s129, %s130
      %p132 = scmp.eq.s32.totalorder %s131, 0
      %s134 = sadd.s32 %s133, 1
      %s135 = scalar_select %p132, %s133, %s134
      %p138 = pneg %p132
      %p139 = scmp.eq.s32.totalorder %s15, 5
      %p140 = por %p138, %p139
      %p141 = scmp.ne.s32.totalorder %s133, %s136
      %p142 = scmp.eq.s32.totalorder %s15, 0
      %p143 = por %p141, %p142
      %p144 = scmp.ne.s32.totalorder %s133, %s136
      %p145 = scmp.eq.s32.totalorder %s20, 5
      %p146 = por %p144, %p145
      %p147 = scmp.ne.s32.totalorder %s136, %s137
      %p148 = scmp.eq.s32.totalorder %s20, 0
      %p149 = por %p147, %p148
      %p150 = scmp.ne.s32.totalorder %s136, %s137
      %p151 = scmp.eq.s32.totalorder %s21, 5
      %p152 = por %p150, %p151
      %p154 = scmp.ne.s32.totalorder %s137, %s153
      %p155 = scmp.eq.s32.totalorder %s21, 0
      %p156 = por %p154, %p155
      %p157 = scmp.le.s32.totalorder 1, %s15
      %p158 = scmp.lt.s32.totalorder %s15, 7
      %p159 = pnand %p157, %p158
      %p160 = pneg %p159
      // Predicated region
      $region9: #{tpu_custom_call.1} parent=5 // pred_check
        _
      $region10: #{tpu_custom_call.1} parent=5 // pred_check_branch
        %162 = sbr.rel (%p159) target = $region12
      $region11: #{tpu_custom_call.1} parent=5 // pred_region
        %s163 = ssub.s32 %s15, 1
        // Predicated region
        $region13: #{tpu_custom_call.1} parent=11 // pred_check
          %p164 = pneg %p62
        $region14: #{tpu_custom_call.1} parent=11 // pred_check_branch
          %166 = sbr.rel (%p164) target = $region16
        $region15: #{tpu_custom_call.1} parent=11 // pred_region
          _
        $region16: #{tpu_custom_call.1} parent=11 // pred_fallthru
          _
        // Predicated region
        $region17: #{tpu_custom_call.1} parent=11 // pred_check
          %p167 = pneg %p83
        $region18: #{tpu_custom_call.1} parent=11 // pred_check_branch
          %169 = sbr.rel (%p167) target = $region20
        $region19: #{tpu_custom_call.1} parent=11 // pred_region
          _
        $region20: #{tpu_custom_call.1} parent=11 // pred_fallthru
          _
      $region12: #{tpu_custom_call.1} parent=5 // pred_fallthru
        _
      %p170 = scmp.lt.s32.totalorder %s15, 6
      // Predicated region
      $region21: #{tpu_custom_call.1} parent=5 // pred_check
        %p171 = pneg %p170
      $region22: #{tpu_custom_call.1} parent=5 // pred_check_branch
        %173 = sbr.rel (%p171) target = $region24
      $region23: #{tpu_custom_call.1} parent=5 // pred_region
        // Predicated region
        $region25: #{tpu_custom_call.1} parent=23 // pred_check
          %p174 = pneg %p111
        $region26: #{tpu_custom_call.1} parent=23 // pred_check_branch
          %176 = sbr.rel (%p174) target = $region28
        $region27: #{tpu_custom_call.1} parent=23 // pred_region
          %s177 = sand.u32 %s101, 1
          %s178 = scalar_lea.sflag [#allocation3], %s177
          %s179 = sand.u32 %s101, 1
          %s180 = smul.addr %s179, 8
          %s181 = scalar_lea.vmem [#allocation2], %s180
          %s182 = ssub.s32 2, %s23
          %s184 = ssub.s32 128, 128
          %185 = vsyncadd %s178, %s184
          %s186 = sadd.s32 %s25, %s24
          %s187 = sadd.s32 %s186, %s182
          %s188 = smul.addr %s22, 3
          %s189 = sadd.s32 %s187, %s188
          %s190 = smul.addr %s189, 128
          %s191 = scalar_lea.hbm %s2, %s190
          %s193 = sshll.u32 %s181, 4
          %s194 = int_to_ptr.vmem [resolvable:$true] %s193
          %196 = dma.hbm_to_vmem [thread:$0]  %s191, 128, %s194, %s178
        $region28: #{tpu_custom_call.1} parent=23 // pred_fallthru
          _
      $region24: #{tpu_custom_call.1} parent=5 // pred_fallthru
        _
      %p197 = scmp.le.s32.totalorder 1, %s15
      %p198 = scmp.lt.s32.totalorder %s15, 7
      %p199 = pnand %p197, %p198
      %p200 = pneg %p199
      // Predicated region
      $region29: #{tpu_custom_call.1} parent=5 // pred_check
        _
      $region30: #{tpu_custom_call.1} parent=5 // pred_check_branch
        %202 = sbr.rel (%p199) target = $region32
      $region31: #{tpu_custom_call.1} parent=5 // pred_region
        %s203 = ssub.s32 %s15, 1
        %s204 = sand.u32 %s104, 1
        %s205 = scalar_lea.sflag [#allocation3], %s204
        %s206 = sand.u32 %s104, 1
        %s207 = smul.addr %s206, 8
        %s208 = scalar_lea.vmem [#allocation2], %s207
        // Predicated region
        $region33: #{tpu_custom_call.1} parent=31 // pred_check
          %p209 = pneg %p117
        $region34: #{tpu_custom_call.1} parent=31 // pred_check_branch
          %211 = sbr.rel (%p209) target = $region36
        $region35: #{tpu_custom_call.1} parent=31 // pred_region
          %212 = dma.done %s205, 128
        $region36: #{tpu_custom_call.1} parent=31 // pred_fallthru
          _
        %p213 = pneg %p62
        %p214 = pneg %p59
        %p215 = pneg %p83
        %p216 = pneg %p80
        %s217 = sand.u32 %s104, 1
        %s218 = scalar_lea.sflag [#allocation3], %s217
        %s219 = sand.u32 %s104, 1
        %s220 = smul.addr %s219, 8
        %s221 = scalar_lea.vmem [#allocation2], %s220
        %p222 = pneg %p117
        %p223 = pneg %p114
        %p224 = pneg %p149
        %p225 = pneg %p146
        %s226 = sand.u32 %s136, 1
        %s227 = scalar_lea.sflag [#allocation4], %s226
        %s228 = sand.u32 %s136, 1
        %s229 = smul.addr %s228, 16
        %s230 = scalar_lea.vmem [#allocation5], %s229
        %s231 = ssub.s32 2, %s27
        %s232 = smul.u32 2, %s28
        %v233 = vld [vmem:[%s208] sm:$0xff]
        %v234 = vld [vmem:[%s0] sm:$0xff]
        %v235 = vld [vmem:[%s0 + $0x8] sm:$0xff]
        %vm236 = vcmask 64512
        %v238 = vsel %vm236, %v234, 0
        %v241 = vsel %vm236, %v235, 0
        %243 = vmatprep.subr.mxu0 0.0
        %244 = vmatpush1.msra.mxu0 0.0
        %245 = vmatprep.subr.mxu0 0.0
        %246 = vmatpush1.msra.mxu0 0.0
        %247 = vmatprep.subr.mxu0 0.0
        %248 = vmatpush1.msra.mxu0 0.0
        %249 = vmatprep.subr.mxu0 0.0
        %250 = vmatpush1.msra.mxu0 0.0
        %251 = vmatprep.subr.mxu0 0.0
        %252 = vmatpush1.msra.mxu0 0.0
        %253 = vmatprep.subr.mxu0 0.0
        %254 = vmatpush1.msra.mxu0 0.0
        %255 = vmatprep.subr.mxu0 0.0
        %256 = vmatpush1.msra.mxu0 0.0
        %257 = vmatprep.subr.mxu0 0.0
        %258 = vmatpush1.msra.mxu0 0.0
        %259 = vmatprep.subr.mxu0 0.0
        %260 = vmatpush1.msra.mxu0 0.0
        %261 = vmatprep.subr.mxu0 0.0
        %262 = vmatpush1.msra.mxu0 0.0
        %263 = vmatprep.subr.mxu0 0.0
        %264 = vmatpush1.msra.mxu0 0.0
        %265 = vmatprep.subr.mxu0 0.0
        %266 = vmatpush1.msra.mxu0 0.0
        %267 = vmatprep.subr.mxu0 0.0
        %268 = vmatpush1.msra.mxu0 0.0
        %269 = vmatprep.subr.mxu0 0.0
        %270 = vmatpush1.msra.mxu0 0.0
        %271 = vmatprep.subr.mxu0 0.0
        %272 = vmatpush1.msra.mxu0 0.0
        %273 = vmatprep.subr.mxu0 0.0
        %274 = vmatpush1.msra.mxu0 %v233
        %275 = vmatprep.subr.mxu0 0.0
        %276 = vmatpush2.msra.mxu0 0.0
        %277 = vmatprep.subr.mxu0 0.0
        %278 = vmatpush2.msra.mxu0 0.0
        %279 = vmatprep.subr.mxu0 0.0
        %280 = vmatpush2.msra.mxu0 0.0
        %281 = vmatprep.subr.mxu0 0.0
        %282 = vmatpush2.msra.mxu0 0.0
        %283 = vmatprep.subr.mxu0 0.0
        %284 = vmatpush2.msra.mxu0 0.0
        %285 = vmatprep.subr.mxu0 0.0
        %286 = vmatpush2.msra.mxu0 0.0
        %287 = vmatprep.subr.mxu0 0.0
        %288 = vmatpush2.msra.mxu0 0.0
        %289 = vmatprep.subr.mxu0 0.0
        %290 = vmatpush2.msra.mxu0 0.0
        %291 = vmatprep.subr.mxu0 0.0
        %292 = vmatpush2.msra.mxu0 0.0
        %293 = vmatprep.subr.mxu0 0.0
        %294 = vmatpush2.msra.mxu0 0.0
        %295 = vmatprep.subr.mxu0 0.0
        %296 = vmatpush2.msra.mxu0 0.0
        %297 = vmatprep.subr.mxu0 0.0
        %298 = vmatpush2.msra.mxu0 0.0
        %299 = vmatprep.subr.mxu0 0.0
        %300 = vmatpush2.msra.mxu0 0.0
        %301 = vmatprep.subr.mxu0 0.0
        %302 = vmatpush2.msra.mxu0 0.0
        %303 = vmatprep.subr.mxu0 0.0
        %304 = vmatpush2.msra.mxu0 0.0
        %305 = vmatprep.subr.mxu0 0.0
        %306 = vmatpush2.msra.mxu0 0.0
        %307 = vmatprep.mubr.f32.mxu0 0.0
        %308 = vmatmul.mubr.f32.gmra.mxu0 %v238
        %v309 = vpop.f32.mrf.mxu0
        %v310 = vadd.f32 0.0, %v309
        %v311 = vpop.f32.mrf.mxu0
        %312 = vmatprep.mubr.f32.mxu0 0.0
        %313 = vmatmul.mubr.f32.gmra.mxu0 %v241
        %v314 = vpop.f32.mrf.mxu0
        %v315 = vadd.f32 0.0, %v314
        %v316 = vpop.f32.mrf.mxu0
        %317 = vdwg.mxu0
        %v318 = vld [vmem:[%s1] sm:$0xff]
        %v320 = vsel %vm236, %v310, 0
        %v323 = vsel %vm236, %v315, 0
        %325 = vmatprep.subr.mxu0 0.0
        %326 = vmatpush1.msra.mxu0 0.0
        %327 = vmatprep.subr.mxu0 0.0
        %328 = vmatpush1.msra.mxu0 0.0
        %329 = vmatprep.subr.mxu0 0.0
        %330 = vmatpush1.msra.mxu0 0.0
        %331 = vmatprep.subr.mxu0 0.0
        %332 = vmatpush1.msra.mxu0 0.0
        %333 = vmatprep.subr.mxu0 0.0
        %334 = vmatpush1.msra.mxu0 0.0
        %335 = vmatprep.subr.mxu0 0.0
        %336 = vmatpush1.msra.mxu0 0.0
        %337 = vmatprep.subr.mxu0 0.0
        %338 = vmatpush1.msra.mxu0 0.0
        %339 = vmatprep.subr.mxu0 0.0
        %340 = vmatpush1.msra.mxu0 0.0
        %341 = vmatprep.subr.mxu0 0.0
        %342 = vmatpush1.msra.mxu0 0.0
        %343 = vmatprep.subr.mxu0 0.0
        %344 = vmatpush1.msra.mxu0 0.0
        %345 = vmatprep.subr.mxu0 0.0
        %346 = vmatpush1.msra.mxu0 0.0
        %347 = vmatprep.subr.mxu0 0.0
        %348 = vmatpush1.msra.mxu0 0.0
        %349 = vmatprep.subr.mxu0 0.0
        %350 = vmatpush1.msra.mxu0 0.0
        %351 = vmatprep.subr.mxu0 0.0
        %352 = vmatpush1.msra.mxu0 0.0
        %353 = vmatprep.subr.mxu0 0.0
        %354 = vmatpush1.msra.mxu0 0.0
        %355 = vmatprep.subr.mxu0 0.0
        %356 = vmatpush1.msra.mxu0 %v318
        %357 = vmatprep.subr.mxu0 0.0
        %358 = vmatpush2.msra.mxu0 0.0
        %359 = vmatprep.subr.mxu0 0.0
        %360 = vmatpush2.msra.mxu0 0.0
        %361 = vmatprep.subr.mxu0 0.0
        %362 = vmatpush2.msra.mxu0 0.0
        %363 = vmatprep.subr.mxu0 0.0
        %364 = vmatpush2.msra.mxu0 0.0
        %365 = vmatprep.subr.mxu0 0.0
        %366 = vmatpush2.msra.mxu0 0.0
        %367 = vmatprep.subr.mxu0 0.0
        %368 = vmatpush2.msra.mxu0 0.0
        %369 = vmatprep.subr.mxu0 0.0
        %370 = vmatpush2.msra.mxu0 0.0
        %371 = vmatprep.subr.mxu0 0.0
        %372 = vmatpush2.msra.mxu0 0.0
        %373 = vmatprep.subr.mxu0 0.0
        %374 = vmatpush2.msra.mxu0 0.0
        %375 = vmatprep.subr.mxu0 0.0
        %376 = vmatpush2.msra.mxu0 0.0
        %377 = vmatprep.subr.mxu0 0.0
        %378 = vmatpush2.msra.mxu0 0.0
        %379 = vmatprep.subr.mxu0 0.0
        %380 = vmatpush2.msra.mxu0 0.0
        %381 = vmatprep.subr.mxu0 0.0
        %382 = vmatpush2.msra.mxu0 0.0
        %383 = vmatprep.subr.mxu0 0.0
        %384 = vmatpush2.msra.mxu0 0.0
        %385 = vmatprep.subr.mxu0 0.0
        %386 = vmatpush2.msra.mxu0 0.0
        %387 = vmatprep.subr.mxu0 0.0
        %388 = vmatpush2.msra.mxu0 0.0
        %389 = vmatprep.mubr.f32.mxu0 0.0
        %390 = vmatmul.mubr.f32.gmra.mxu0 %v320
        %v391 = vpop.f32.mrf.mxu0
        %v392 = vadd.f32 0.0, %v391
        %v393 = vpop.f32.mrf.mxu0
        %394 = vmatprep.mubr.f32.mxu0 0.0
        %395 = vmatmul.mubr.f32.gmra.mxu0 %v323
        %v396 = vpop.f32.mrf.mxu0
        %v397 = vadd.f32 0.0, %v396
        %v398 = vpop.f32.mrf.mxu0
        %399 = vdwg.mxu0
        %vm400 = vcmask 130048
        %401 = vst.msk [vmem:[%s230] sm:$0xff] %vm400, %v392
        %402 = vst.msk [vmem:[%s230 + $0x8] sm:$0xff] %vm400, %v397
        %s403 = sand.u32 %s136, 1
        %s404 = scalar_lea.sflag [#allocation4], %s403
        %s405 = sand.u32 %s136, 1
        %s406 = smul.addr %s405, 16
        %s407 = scalar_lea.vmem [#allocation5], %s406
        // Predicated region
        $region37: #{tpu_custom_call.1} parent=31 // pred_check
          %p408 = pneg %p146
        $region38: #{tpu_custom_call.1} parent=31 // pred_check_branch
          %410 = sbr.rel (%p408) target = $region40
        $region39: #{tpu_custom_call.1} parent=31 // pred_region
          %s411 = smul.u32 2, %s28
          %s413 = ssub.s32 256, 256
          %414 = vsyncadd %s404, %s413
          %s415 = sadd.s32 %s29, %s411
          %s416 = smul.addr %s27, 2
          %s417 = sadd.s32 %s415, %s416
          %s418 = smul.addr %s26, 6
          %s419 = sadd.s32 %s417, %s418
          %s420 = smul.addr %s419, 128
          %s421 = scalar_lea.hbm %s3, %s420
          %s422 = sshll.u32 %s407, 4
          %s423 = int_to_ptr.vmem [resolvable:$true] %s422
          %428 = dma.vmem_to_hbm [thread:$0]  %s423, 256, %s421, %s404, 128, 128, 8
        $region40: #{tpu_custom_call.1} parent=31 // pred_fallthru
          _
      $region32: #{tpu_custom_call.1} parent=5 // pred_fallthru
        _
      %p429 = scmp.le.s32.totalorder 2, %s15
      // Predicated region
      $region41: #{tpu_custom_call.1} parent=5 // pred_check
        %p430 = pneg %p429
      $region42: #{tpu_custom_call.1} parent=5 // pred_check_branch
        %432 = sbr.rel (%p430) target = $region44
      $region43: #{tpu_custom_call.1} parent=5 // pred_region
        %s433 = ssub.s32 %s15, 2
        // Predicated region
        $region45: #{tpu_custom_call.1} parent=43 // pred_check
          %p434 = pneg %p152
        $region46: #{tpu_custom_call.1} parent=43 // pred_check_branch
          %436 = sbr.rel (%p434) target = $region48
        $region47: #{tpu_custom_call.1} parent=43 // pred_region
          %s437 = sand.u32 %s137, 1
          %s438 = scalar_lea.sflag [#allocation4], %s437
          %s439 = sand.u32 %s137, 1
          %s440 = smul.addr %s439, 16
          %s441 = scalar_lea.vmem [#allocation5], %s440
          %442 = dma.done %s438, 256
        $region48: #{tpu_custom_call.1} parent=43 // pred_fallthru
          _
      $region44: #{tpu_custom_call.1} parent=5 // pred_fallthru
        _
    $region6: #{tpu_custom_call.1} parent=1 // loop_footer
      %s19 = sadd.s32 1, %s15
    $region7: #{tpu_custom_call.1} parent=1 // loop_footer_branch
      %14 = sbr.rel target = $region3
    $region8: #{tpu_custom_call.1} parent=1 // loop_exit
      _
    %443 = vsyncpa [#allocation3], 1
    %s444 = scalar_lea.sflag [#allocation3], 1
    %445 = vsyncpa %s444, 1
    %446 = vsyncpa [#allocation4], 1
    %s447 = scalar_lea.sflag [#allocation4], 1
    %448 = vsyncpa %s447, 1

</llo_original>
